<compile_context>
chip_gen: v7x
topology: tpu7x:2x2x1
jax: 0.10.0
libtpu: 0.0.40
codegen_flags: <defaults>
</compile_context>

<pallas_src>
import jax
import jax.numpy as jnp
from jax.experimental import pallas as pl
from jax.experimental.pallas import tpu as pltpu


_LANES = 512                       # lane-dense last dim (multiple of 128)
_TARGET_TILE_BYTES = 2 * 1024 * 1024   # ~2 MiB per tile (mem-bound sweet spot)


def _square_kernel(x_ref, o_ref):
    # Elementwise square of the whole VMEM tile (VPU).
    x = x_ref[...]
    o_ref[...] = x * x


def _sublane_multiple(dtype) -> int:
    # Second-to-last block dim must respect dtype packing: 8 rows per vreg for
    # 32-bit, 16 for 16-bit, 32 for 8-bit dtypes.
    itemsize = jnp.dtype(dtype).itemsize
    return {4: 8, 2: 16, 1: 32}.get(itemsize, 8)


def square_layer(x: jax.Array) -> jax.Array:
    """Pallas implementation of SquareLayer.forward: returns x ** 2.

    Works for any shape/dtype: the array is flattened to a lane-dense
    (rows, 512) slab (zero-padded as needed), squared with a row-tiled,
    auto-pipelined Pallas kernel, then sliced/reshaped back.
    """
    orig_shape = x.shape
    dtype = x.dtype
    n = x.size
    itemsize = jnp.dtype(dtype).itemsize
    sub = _sublane_multiple(dtype)

    # Rows needed to hold all elements at lane width _LANES.
    rows_needed = pl.cdiv(n, _LANES)

    # Tile rows: aim for ~2 MiB per tile, keep it a multiple of the sublane
    # packing, and never exceed the (sublane-rounded) total row count.
    target_rows = max(sub, ((_TARGET_TILE_BYTES // (_LANES * itemsize)) // sub) * sub)
    rows_rounded = pl.cdiv(rows_needed, sub) * sub
    tile_r = min(target_rows, rows_rounded)

    # Zero-pad the flat array so tile_r evenly divides the row count
    # (square(0) == 0, and the pad region is sliced off afterwards).
    rows = pl.cdiv(rows_needed, tile_r) * tile_r
    padded = rows * _LANES
    xf = x.reshape(-1)
    if padded != n:
        xf = jnp.pad(xf, (0, padded - n))
    x2d = xf.reshape(rows, _LANES)

    out2d = pl.pallas_call(
        _square_kernel,
        out_shape=jax.ShapeDtypeStruct((rows, _LANES), dtype),
        grid=(rows // tile_r,),
        in_specs=[pl.BlockSpec((tile_r, _LANES), lambda i: (i, 0))],
        out_specs=pl.BlockSpec((tile_r, _LANES), lambda i: (i, 0)),
        compiler_params=pltpu.CompilerParams(
            dimension_semantics=("parallel",),
        ),
    )(x2d)

    out = out2d.reshape(-1)
    if padded != n:
        out = out[:n]
    return out.reshape(orig_shape)


if __name__ == "__main__":
    key = jax.random.PRNGKey(0)
    # NCHW input consistent with SCCNet-style conv activations, small shape.
    x = jax.random.normal(key, (2, 4, 16, 16), dtype=jnp.float32)

    y = square_layer(x)
    jax.block_until_ready(y)

    # Correctness check against plain JAX reference (x ** 2).
    ref = x ** 2
    assert y.shape == x.shape and y.dtype == x.dtype
    assert jnp.allclose(y, ref, atol=1e-6, rtol=1e-6)

    print("KERNEL_OK")
</pallas_src>

<mosaic_0001>
module attributes {stable_mosaic.version = 11 : i64} {
  func.func @_square_kernel(%arg0: i32, %arg1: memref<8x512xf32, #tpu.memory_space<vmem>>, %arg2: memref<8x512xf32, #tpu.memory_space<vmem>>) attributes {dimension_semantics = [#tpu.dimension_semantics<parallel>], iteration_bounds = array<i64: 1>, scalar_prefetch = 0 : i64, scratch_operands = 0 : i64, tpu.core_type = #tpu.core_type<tc>, window_params = [{transform_indices = @transform_0, window_bounds = array<i64: 8, 512>}, {transform_indices = @transform_1, window_bounds = array<i64: 8, 512>}]} {
    %c0 = arith.constant 0 : index
    %c0_0 = arith.constant 0 : index
    %0 = vector.load %arg1[%c0, %c0_0] : memref<8x512xf32, #tpu.memory_space<vmem>>, vector<8x512xf32>
    %1 = arith.mulf %0, %0 : vector<8x512xf32>
    %c0_1 = arith.constant 0 : index
    %c0_2 = arith.constant 0 : index
    %2 = vector.load %arg2[%c0_1, %c0_2] : memref<8x512xf32, #tpu.memory_space<vmem>>, vector<8x512xf32>
    tpu.vector_store %arg2[%c0_1, %c0_2], %1 {strides = array<i32>} : memref<8x512xf32, #tpu.memory_space<vmem>>, vector<8x512xf32>,
    return
  }
  func.func @transform_0(%arg0: i32) -> (i32, i32) {
    %c0_i32 = arith.constant 0 : i32
    %c0_i32_0 = arith.constant 0 : i32
    return %arg0, %c0_i32 : i32, i32
  }
  func.func @transform_1(%arg0: i32) -> (i32, i32) {
    %c0_i32 = arith.constant 0 : i32
    %c0_i32_0 = arith.constant 0 : i32
    return %arg0, %c0_i32 : i32, i32
  }
}

</mosaic_0001>

<llo_original>
// kernel: tpu_custom_call.1
$region0: #{tpu_custom_call.1}
  #allocation0 [shape = 'u32[]', space=smem, size = 0x4, offset = 0x4, fixed_abs, tag = 'smem constant byte address 0x4 - core index']
  #allocation1 [shape = 'u32[144,128]{1,0:T(1,128)}', space=vmem, size = 0x12000, scoped, tag = 'internal scratch']
  %s0 = inlined_call_operand.hbm [shape: f32[8,512], index: 0, kind: input, shape index: {}]
  %s1 = inlined_call_operand.hbm [shape: f32[8,512], index: 1, kind: output, shape index: {}]
  %s2 = sld [smem:[#allocation0]]
  $region18: #{tpu_custom_call.1} parent=0
    _
  %s4 = ssub.s32 1, %s2
  %s5 = scalar_select 0, %s4, %s2
  $region1: #{tpu_custom_call.1} parent=0
    #allocation2 [shape = 'u8[16384]{0}', space=vmem, size = 0x4000, scoped, tag = 'input window, operand 0, single buffered']
    #allocation3 [shape = 's32[1]{0}', space=sflag, size = 0x4, scoped, tag = 'scoped memory for tpu_custom_call.1']
    #allocation4 [shape = 's32[1]{0}', space=sflag, size = 0x4, scoped, tag = 'scoped memory for tpu_custom_call.1']
    #allocation5 [shape = 'u8[16384]{0}', space=vmem, size = 0x4000, scoped, tag = 'output window, operand 0, single buffered']
    %6 = vsyncpa [#allocation3], 0
    %7 = vsyncpa [#allocation4], 0
    // Predicated region
    $region2: #{tpu_custom_call.1} parent=1 // pred_check
      _
    $region3: #{tpu_custom_call.1} parent=1 // pred_check_branch
      %9 = sbr.rel (0) target = $region5
    $region4: #{tpu_custom_call.1} parent=1 // pred_region
      %s11 = ssub.s32 512, 512
      %12 = vsyncadd [#allocation3], %s11
      %s14 = sshll.u32 [#allocation2], 4
      %s15 = int_to_ptr.vmem [resolvable:$true] %s14
      %17 = dma.hbm_to_vmem [thread:$0]  %s0, 512, %s15, [#allocation3]
    $region5: #{tpu_custom_call.1} parent=1 // pred_fallthru
      _
    // Predicated region
    $region6: #{tpu_custom_call.1} parent=1 // pred_check
      _
    $region7: #{tpu_custom_call.1} parent=1 // pred_check_branch
      %19 = sbr.rel (0) target = $region9
    $region8: #{tpu_custom_call.1} parent=1 // pred_region
      %20 = dma.done [#allocation3], 512
    $region9: #{tpu_custom_call.1} parent=1 // pred_fallthru
      _
    %v21 = vld [vmem:[#allocation2] sm:$0xff]
    %v22 = vld [vmem:[#allocation2 + $0x8] sm:$0xff]
    %v23 = vld [vmem:[#allocation2 + $0x10] sm:$0xff]
    %v24 = vld [vmem:[#allocation2 + $0x18] sm:$0xff]
    %v25 = vmul.f32 %v21, %v21
    %v26 = vmul.f32 %v22, %v22
    %v27 = vmul.f32 %v23, %v23
    %v28 = vmul.f32 %v24, %v24
    %29 = vst [vmem:[#allocation5] sm:$0xff] %v25
    %30 = vst [vmem:[#allocation5 + $0x8] sm:$0xff] %v26
    %31 = vst [vmem:[#allocation5 + $0x10] sm:$0xff] %v27
    %32 = vst [vmem:[#allocation5 + $0x18] sm:$0xff] %v28
    // Predicated region
    $region10: #{tpu_custom_call.1} parent=1 // pred_check
      _
    $region11: #{tpu_custom_call.1} parent=1 // pred_check_branch
      %34 = sbr.rel (0) target = $region13
    $region12: #{tpu_custom_call.1} parent=1 // pred_region
      %s36 = ssub.s32 512, 512
      %37 = vsyncadd [#allocation4], %s36
      %s39 = sshll.u32 [#allocation5], 4
      %s40 = int_to_ptr.vmem [resolvable:$true] %s39
      %42 = dma.vmem_to_hbm [thread:$0]  %s40, 512, %s1, [#allocation4]
    $region13: #{tpu_custom_call.1} parent=1 // pred_fallthru
      _
    // Predicated region
    $region14: #{tpu_custom_call.1} parent=1 // pred_check
      _
    $region15: #{tpu_custom_call.1} parent=1 // pred_check_branch
      %44 = sbr.rel (0) target = $region17
    $region16: #{tpu_custom_call.1} parent=1 // pred_region
      %45 = dma.done [#allocation4], 512
    $region17: #{tpu_custom_call.1} parent=1 // pred_fallthru
      _
    %46 = vsyncpa [#allocation3], 1
    %47 = vsyncpa [#allocation4], 1

</llo_original>
